<compile_context>
chip_gen: v7x
topology: tpu7x:2x2x1
jax: 0.10.0
libtpu: 0.0.40
codegen_flags: <defaults>
</compile_context>

<pallas_src>
import math

import numpy as np
import jax
import jax.numpy as jnp
from jax.experimental import pallas as pl
from jax.experimental.pallas import tpu as pltpu


def _round_up(x, m):
    return ((x + m - 1) // m) * m


def _fused_kernel(x_ref, wx_ref, sel_ref, tgt_ref, we_ref,
                  bias_ref, s2_ref, b2_ref, o_ref):
    # x_ref:   (tm, D)       raw rows: [cat ids as floats | cont feats]
    # wx_ref:  (D, OUT)      BN1-folded linear weight, zero rows for cat ids
    # sel_ref: (D, Cpad)     0/1 selector: routes cat-id column i to lane seg i
    # tgt_ref: (1, Cpad)     per-lane local index (lane - segment offset); -1 pad
    # we_ref:  (Cpad, OUT)   folded (table_i @ W_emb_block_i), zero padded
    # bias/s2/b2: (1, OUT)   BN1-folded bias; eval-mode output BN scale/shift
    x = x_ref[...]

    # Fused embedding lookup: one tiny MXU matmul spreads each categorical id
    # across its lane segment, a single VPU compare builds the combined
    # one-hot (segments are disjoint, ids/targets are small exact integers).
    a = jnp.dot(x, sel_ref[...], preferred_element_type=jnp.float32)     # (tm, Cpad)
    hot = (a == tgt_ref[...]).astype(jnp.float32)                        # (tm, Cpad)

    # Continuous contribution: wx has zero rows for the cat-id columns, so
    # multiplying the full raw tile is exact.  MXU has huge slack here, so the
    # two dots stay separate (no in-kernel lane concat of [x | hot]).
    z = jnp.dot(x, wx_ref[...], preferred_element_type=jnp.float32)      # (tm, OUT)
    z = z + jnp.dot(hot, we_ref[...], preferred_element_type=jnp.float32)

    z = jnp.maximum(z + bias_ref[...], 0.0)        # ReLU (Dropout = identity, eval)
    # TODO(synk): lane-dense (tm//8, 128) output relayout (out_dim=16 < 128 ->
    # masked vst / lane-sparse writeback) only if a bundle dump shows the
    # store/writeback path is the binder after the one-hot cost reduction.
    o_ref[...] = z * s2_ref[...] + b2_ref[...]     # output BatchNorm (eval affine)


def attribute_embedding_forward(x, params, n_disc, n_cont, *, tm=2048):
    """x: [B, S, n_disc + n_cont] float32 -> [B, S, out_dim] float32 (eval mode)."""
    B, S, D = x.shape
    assert D == n_disc + n_cont
    N = B * S
    x2d = x.reshape(N, D).astype(jnp.float32)

    out_dim = int(params["lin_w"].shape[1])
    eps = 1e-5
    hi = jax.lax.Precision.HIGHEST

    # ---- eval-mode parameter folding (plain-JAX glue, all tiny) -------------
    # cont BatchNorm folded into the linear weight / bias (exact, pre-ReLU):
    s1c = params["bn1_gamma"] / jnp.sqrt(params["bn1_var"] + eps)
    b1c = params["bn1_beta"] - params["bn1_mean"] * s1c
    w_cont = params["lin_w"][:n_cont]                            # (n_cont, OUT)
    wx = jnp.concatenate(
        [jnp.zeros((n_disc, out_dim), jnp.float32),              # cat-id columns
         s1c[:, None] * w_cont], axis=0)                         # (D, OUT)
    bias = (params["lin_b"]
            + jnp.matmul(b1c, w_cont, precision=hi))[None, :]    # (1, OUT)

    # embedding tables folded into the linear weight (one-hot formulation):
    sizes = [int(t.shape[0]) for t in params["emb_tables"]]
    c_total = sum(sizes)
    c_pad = _round_up(max(c_total, 8), 128)
    blocks, col = [], n_cont
    for t in params["emb_tables"]:
        sz = int(t.shape[1])
        blocks.append(jnp.matmul(t.astype(jnp.float32),
                                 params["lin_w"][col:col + sz], precision=hi))
        col += sz
    we = jnp.concatenate(blocks, axis=0)                         # (c_total, OUT)
    we = jnp.pad(we, ((0, c_pad - c_total), (0, 0)))

    # one-hot selector / per-lane local target (static constants):
    # NOTE: ids are assumed integer-valued floats in [0, n_cat_i) (same as the
    # torch .long() cast on valid inputs); out-of-range ids silently embed as 0.
    sel_np = np.zeros((D, c_pad), np.float32)
    tgt_np = np.full((1, c_pad), -1.0, np.float32)   # padding lanes never match
    off = 0
    for i, ncat in enumerate(sizes):
        sel_np[i, off:off + ncat] = 1.0
        tgt_np[0, off:off + ncat] = np.arange(ncat, dtype=np.float32)
        off += ncat
    sel = jnp.asarray(sel_np)
    tgt = jnp.asarray(tgt_np)

    # output BatchNorm as a post-ReLU affine (not foldable through ReLU):
    s2c = params["bn2_gamma"] / jnp.sqrt(params["bn2_var"] + eps)
    b2c = params["bn2_beta"] - params["bn2_mean"] * s2c
    s2, b2 = s2c[None, :], b2c[None, :]

    # ---- tiling --------------------------------------------------------------
    # VMEM budget at tm (lane-padded): in 2*tm*128*4 + out 2*tm*128*4
    # + (tm,128) intermediates ~2*tm*128*4  ->  ~8 MiB at tm=2048, ~16 at 4096,
    # well inside the 32 MiB scoped limit requested below on all generations.
    tm = max(8, (min(int(tm), 4096) // 8) * 8)
    # keep >= 2 grid steps so the "parallel" axis shards across both v7x TCs
    half = _round_up(max((N + 1) // 2, 1), 8)
    tm = min(tm, max(half, 8))
    n_pad = (-N) % tm
    x_p = jnp.pad(x2d, ((0, n_pad), (0, 0))) if n_pad else x2d
    Np = N + n_pad

    out = pl.pallas_call(
        _fused_kernel,
        out_shape=jax.ShapeDtypeStruct((Np, out_dim), jnp.float32),
        grid_spec=pltpu.PrefetchScalarGridSpec(
            num_scalar_prefetch=0,
            grid=(Np // tm,),
            in_specs=[
                pl.BlockSpec((tm, D), lambda i: (i, 0)),            # raw rows
                pl.BlockSpec((D, out_dim), lambda i: (0, 0)),       # wx
                pl.BlockSpec((D, c_pad), lambda i: (0, 0)),         # sel
                pl.BlockSpec((1, c_pad), lambda i: (0, 0)),         # tgt
                pl.BlockSpec((c_pad, out_dim), lambda i: (0, 0)),   # we
                pl.BlockSpec((1, out_dim), lambda i: (0, 0)),       # bias
                pl.BlockSpec((1, out_dim), lambda i: (0, 0)),       # s2
                pl.BlockSpec((1, out_dim), lambda i: (0, 0)),       # b2
            ],
            out_specs=pl.BlockSpec((tm, out_dim), lambda i: (i, 0)),
        ),
        compiler_params=pltpu.CompilerParams(
            dimension_semantics=("parallel",),
            vmem_limit_bytes=32 * 1024 * 1024),
    )(x_p, wx, sel, tgt, we, bias, s2, b2)

    return out[:N].reshape(B, S, out_dim)


def reference_forward(x, params, n_disc, n_cont):
    """Pure-JAX mirror of the PyTorch eval-mode forward, for verification."""
    eps = 1e-5
    x_cat = x[..., :n_disc].astype(jnp.int32)
    x_cont = x[..., n_disc:]
    xc = (x_cont - params["bn1_mean"]) / jnp.sqrt(params["bn1_var"] + eps) \
        * params["bn1_gamma"] + params["bn1_beta"]
    embs = [params["emb_tables"][i][x_cat[..., i]] for i in range(n_disc)]
    h = jnp.concatenate([xc] + embs, axis=-1)
    y = jnp.maximum(h @ params["lin_w"] + params["lin_b"], 0.0)
    y = (y - params["bn2_mean"]) / jnp.sqrt(params["bn2_var"] + eps) \
        * params["bn2_gamma"] + params["bn2_beta"]
    return y


if __name__ == "__main__":
    # Module configuration (shapes follow the PyTorch __init__).
    n_cont = 6
    n_disc_list = [20, 16, 10, 30]
    n_disc = len(n_disc_list)
    emb_szs = [(nc, min(8, (nc + 1) // 2)) for nc in n_disc_list]  # -> [8,8,5,8]
    n_emb = sum(sz for _, sz in emb_szs)                           # 29
    out_dim_raw = (n_emb + n_cont + 1) // 2                        # 18
    out_dim = max(i for i in [16, 32, 64, 128] if i <= out_dim_raw)  # 16

    key = jax.random.PRNGKey(0)
    keys = jax.random.split(key, 13)

    emb_tables = [
        jax.random.normal(jax.random.fold_in(keys[0], i), (cat, sz), jnp.float32)
        for i, (cat, sz) in enumerate(emb_szs)
    ]
    fan_in = n_emb + n_cont
    k = 1.0 / math.sqrt(fan_in)
    params = dict(
        emb_tables=emb_tables,
        lin_w=jax.random.uniform(keys[1], (fan_in, out_dim), jnp.float32, -k, k),
        lin_b=jax.random.uniform(keys[2], (out_dim,), jnp.float32, -k, k),
        bn1_gamma=jax.random.uniform(keys[3], (n_cont,), jnp.float32, 0.5, 1.5),
        bn1_beta=0.1 * jax.random.normal(keys[4], (n_cont,), jnp.float32),
        bn1_mean=0.1 * jax.random.normal(keys[5], (n_cont,), jnp.float32),
        bn1_var=jax.random.uniform(keys[6], (n_cont,), jnp.float32, 0.5, 1.5),
        bn2_gamma=jax.random.uniform(keys[7], (out_dim,), jnp.float32, 0.5, 1.5),
        bn2_beta=0.1 * jax.random.normal(keys[8], (out_dim,), jnp.float32),
        bn2_mean=0.1 * jax.random.normal(keys[9], (out_dim,), jnp.float32),
        bn2_var=jax.random.uniform(keys[10], (out_dim,), jnp.float32, 0.5, 1.5),
    )

    def make_input(kcat, kcont, batch, seq):
        cat_cols = [
            jax.random.randint(jax.random.fold_in(kcat, i), (batch, seq, 1), 0, nc)
            for i, nc in enumerate(n_disc_list)
        ]
        x_cat = jnp.concatenate(cat_cols, axis=-1).astype(jnp.float32)
        x_cont = jax.random.normal(kcont, (batch, seq, n_cont), jnp.float32)
        return jnp.concatenate([x_cat, x_cont], axis=-1)

    # Tiny case (matches the module's toy shapes): tm caps to 8 -> 2 grid steps.
    batch, seq = 2, 8
    x = make_input(keys[11], keys[12], batch, seq)              # [2, 8, 10]
    out = attribute_embedding_forward(x, params, n_disc, n_cont)
    out = jax.block_until_ready(out)
    assert out.shape == (batch, seq, out_dim), out.shape
    ref = reference_forward(x, params, n_disc, n_cont)
    assert jnp.allclose(out, ref, atol=1e-4, rtol=1e-4), \
        float(jnp.max(jnp.abs(out - ref)))

    # Medium case: N=1024 rows -> tm capped to N/2=512 -> 2 steps (v7x megacore).
    x2 = make_input(jax.random.fold_in(keys[11], 99),
                    jax.random.fold_in(keys[12], 99), 4, 256)
    out2 = attribute_embedding_forward(x2, params, n_disc, n_cont)
    out2 = jax.block_until_ready(out2)
    ref2 = reference_forward(x2, params, n_disc, n_cont)
    assert jnp.allclose(out2, ref2, atol=1e-4, rtol=1e-4), \
        float(jnp.max(jnp.abs(out2 - ref2)))

    # Larger case: N=8192 rows -> default tm=2048 -> 4 grid steps.
    x3 = make_input(jax.random.fold_in(keys[11], 7),
                    jax.random.fold_in(keys[12], 7), 16, 512)
    out3 = attribute_embedding_forward(x3, params, n_disc, n_cont)
    out3 = jax.block_until_ready(out3)
    ref3 = reference_forward(x3, params, n_disc, n_cont)
    assert jnp.allclose(out3, ref3, atol=1e-4, rtol=1e-4), \
        float(jnp.max(jnp.abs(out3 - ref3)))

    print("KERNEL_OK")
</pallas_src>

<mosaic_0001>
module attributes {stable_mosaic.version = 11 : i64} {
  func.func @_fused_kernel(%arg0: i32, %arg1: memref<8x10xf32, #tpu.memory_space<vmem>>, %arg2: memref<10x16xf32, #tpu.memory_space<vmem>>, %arg3: memref<10x128xf32, #tpu.memory_space<vmem>>, %arg4: memref<1x128xf32, #tpu.memory_space<vmem>>, %arg5: memref<128x16xf32, #tpu.memory_space<vmem>>, %arg6: memref<1x16xf32, #tpu.memory_space<vmem>>, %arg7: memref<1x16xf32, #tpu.memory_space<vmem>>, %arg8: memref<1x16xf32, #tpu.memory_space<vmem>>, %arg9: memref<8x16xf32, #tpu.memory_space<vmem>>) attributes {dimension_semantics = [#tpu.dimension_semantics<parallel>], iteration_bounds = array<i64: 2>, scalar_prefetch = 0 : i64, scratch_operands = 0 : i64, tpu.core_type = #tpu.core_type<tc>, window_params = [{transform_indices = @transform_0, window_bounds = array<i64: 8, 10>}, {pipeline_mode = #tpu.pipeline_mode<synchronous>, transform_indices = @transform_1, window_bounds = array<i64: 10, 16>}, {pipeline_mode = #tpu.pipeline_mode<synchronous>, transform_indices = @transform_2, window_bounds = array<i64: 10, 128>}, {pipeline_mode = #tpu.pipeline_mode<synchronous>, transform_indices = @transform_3, window_bounds = array<i64: 1, 128>}, {pipeline_mode = #tpu.pipeline_mode<synchronous>, transform_indices = @transform_4, window_bounds = array<i64: 128, 16>}, {pipeline_mode = #tpu.pipeline_mode<synchronous>, transform_indices = @transform_5, window_bounds = array<i64: 1, 16>}, {pipeline_mode = #tpu.pipeline_mode<synchronous>, transform_indices = @transform_6, window_bounds = array<i64: 1, 16>}, {pipeline_mode = #tpu.pipeline_mode<synchronous>, transform_indices = @transform_7, window_bounds = array<i64: 1, 16>}, {transform_indices = @transform_8, window_bounds = array<i64: 8, 16>}]} {
    %c0 = arith.constant 0 : index
    %c0_0 = arith.constant 0 : index
    %0 = vector.load %arg1[%c0, %c0_0] : memref<8x10xf32, #tpu.memory_space<vmem>>, vector<8x10xf32>
    %c0_1 = arith.constant 0 : index
    %c0_2 = arith.constant 0 : index
    %1 = vector.load %arg3[%c0_1, %c0_2] : memref<10x128xf32, #tpu.memory_space<vmem>>, vector<10x128xf32>
    %cst = arith.constant dense<0.000000e+00> : vector<8x128xf32>
    %2 = tpu.matmul %0, %1, %cst {dimension_numbers = #tpu.dot_dimension_numbers<[1], [0], [0], [1], [0, 0, 1, 1], [], []>} : vector<8x10xf32>, vector<10x128xf32>, vector<8x128xf32> -> vector<8x128xf32>
    %c0_3 = arith.constant 0 : index
    %c0_4 = arith.constant 0 : index
    %3 = vector.load %arg4[%c0_3, %c0_4] : memref<1x128xf32, #tpu.memory_space<vmem>>, vector<1x128xf32>
    %4 = vector.broadcast %3 : vector<1x128xf32> to vector<8x128xf32>
    %5 = arith.cmpf oeq, %2, %4 : vector<8x128xf32>
    %6 = arith.extui %5 : vector<8x128xi1> to vector<8x128xi32>
    %7 = arith.sitofp %6 : vector<8x128xi32> to vector<8x128xf32>
    %c0_5 = arith.constant 0 : index
    %c0_6 = arith.constant 0 : index
    %8 = vector.load %arg2[%c0_5, %c0_6] : memref<10x16xf32, #tpu.memory_space<vmem>>, vector<10x16xf32>
    %cst_7 = arith.constant dense<0.000000e+00> : vector<8x16xf32>
    %9 = tpu.matmul %0, %8, %cst_7 {dimension_numbers = #tpu.dot_dimension_numbers<[1], [0], [0], [1], [0, 0, 1, 1], [], []>} : vector<8x10xf32>, vector<10x16xf32>, vector<8x16xf32> -> vector<8x16xf32>
    %c0_8 = arith.constant 0 : index
    %c0_9 = arith.constant 0 : index
    %10 = vector.load %arg5[%c0_8, %c0_9] : memref<128x16xf32, #tpu.memory_space<vmem>>, vector<128x16xf32>
    %cst_10 = arith.constant dense<0.000000e+00> : vector<8x16xf32>
    %11 = tpu.matmul %7, %10, %cst_10 {dimension_numbers = #tpu.dot_dimension_numbers<[1], [0], [0], [1], [0, 0, 1, 1], [], []>} : vector<8x128xf32>, vector<128x16xf32>, vector<8x16xf32> -> vector<8x16xf32>
    %12 = arith.addf %9, %11 : vector<8x16xf32>
    %c0_11 = arith.constant 0 : index
    %c0_12 = arith.constant 0 : index
    %13 = vector.load %arg6[%c0_11, %c0_12] : memref<1x16xf32, #tpu.memory_space<vmem>>, vector<1x16xf32>
    %14 = vector.broadcast %13 : vector<1x16xf32> to vector<8x16xf32>
    %15 = arith.addf %12, %14 : vector<8x16xf32>
    %cst_13 = arith.constant 0.000000e+00 : f32
    %16 = vector.broadcast %cst_13 : f32 to vector<8x16xf32>
    %17 = arith.maximumf %15, %16 : vector<8x16xf32>
    %c0_14 = arith.constant 0 : index
    %c0_15 = arith.constant 0 : index
    %18 = vector.load %arg7[%c0_14, %c0_15] : memref<1x16xf32, #tpu.memory_space<vmem>>, vector<1x16xf32>
    %19 = vector.broadcast %18 : vector<1x16xf32> to vector<8x16xf32>
    %20 = arith.mulf %17, %19 : vector<8x16xf32>
    %c0_16 = arith.constant 0 : index
    %c0_17 = arith.constant 0 : index
    %21 = vector.load %arg8[%c0_16, %c0_17] : memref<1x16xf32, #tpu.memory_space<vmem>>, vector<1x16xf32>
    %22 = vector.broadcast %21 : vector<1x16xf32> to vector<8x16xf32>
    %23 = arith.addf %20, %22 : vector<8x16xf32>
    %c0_18 = arith.constant 0 : index
    %c0_19 = arith.constant 0 : index
    %24 = vector.load %arg9[%c0_18, %c0_19] : memref<8x16xf32, #tpu.memory_space<vmem>>, vector<8x16xf32>
    tpu.vector_store %arg9[%c0_18, %c0_19], %23 {strides = array<i32>} : memref<8x16xf32, #tpu.memory_space<vmem>>, vector<8x16xf32>,
    return
  }
  func.func @transform_0(%arg0: i32) -> (i32, i32) {
    %c0_i32 = arith.constant 0 : i32
    %c0_i32_0 = arith.constant 0 : i32
    return %arg0, %c0_i32 : i32, i32
  }
  func.func @transform_1(%arg0: i32) -> (i32, i32) {
    %c0_i32 = arith.constant 0 : i32
    %c0_i32_0 = arith.constant 0 : i32
    %c0_i32_1 = arith.constant 0 : i32
    return %c0_i32, %c0_i32_0 : i32, i32
  }
  func.func @transform_2(%arg0: i32) -> (i32, i32) {
    %c0_i32 = arith.constant 0 : i32
    %c0_i32_0 = arith.constant 0 : i32
    %c0_i32_1 = arith.constant 0 : i32
    return %c0_i32, %c0_i32_0 : i32, i32
  }
  func.func @transform_3(%arg0: i32) -> (i32, i32) {
    %c0_i32 = arith.constant 0 : i32
    %c0_i32_0 = arith.constant 0 : i32
    %c0_i32_1 = arith.constant 0 : i32
    return %c0_i32, %c0_i32_0 : i32, i32
  }
  func.func @transform_4(%arg0: i32) -> (i32, i32) {
    %c0_i32 = arith.constant 0 : i32
    %c0_i32_0 = arith.constant 0 : i32
    %c0_i32_1 = arith.constant 0 : i32
    return %c0_i32, %c0_i32_0 : i32, i32
  }
  func.func @transform_5(%arg0: i32) -> (i32, i32) {
    %c0_i32 = arith.constant 0 : i32
    %c0_i32_0 = arith.constant 0 : i32
    %c0_i32_1 = arith.constant 0 : i32
    return %c0_i32, %c0_i32_0 : i32, i32
  }
  func.func @transform_6(%arg0: i32) -> (i32, i32) {
    %c0_i32 = arith.constant 0 : i32
    %c0_i32_0 = arith.constant 0 : i32
    %c0_i32_1 = arith.constant 0 : i32
    return %c0_i32, %c0_i32_0 : i32, i32
  }
  func.func @transform_7(%arg0: i32) -> (i32, i32) {
    %c0_i32 = arith.constant 0 : i32
    %c0_i32_0 = arith.constant 0 : i32
    %c0_i32_1 = arith.constant 0 : i32
    return %c0_i32, %c0_i32_0 : i32, i32
  }
  func.func @transform_8(%arg0: i32) -> (i32, i32) {
    %c0_i32 = arith.constant 0 : i32
    %c0_i32_0 = arith.constant 0 : i32
    return %arg0, %c0_i32 : i32, i32
  }
}

</mosaic_0001>

<llo_original>
// kernel: tpu_custom_call.1
$region0: #{tpu_custom_call.1}
  #allocation0 [shape = 'u32[]', space=smem, size = 0x4, offset = 0x4, fixed_abs, tag = 'smem constant byte address 0x4 - core index']
  #allocation1 [shape = 'u32[144,128]{1,0:T(1,128)}', space=vmem, size = 0x12000, scoped, tag = 'internal scratch']
  %s0 = inlined_call_operand.vmem [shape: f32[16,10], index: 0, kind: input, shape index: {}]
  %s1 = inlined_call_operand.vmem [shape: f32[10,16], index: 1, kind: input, shape index: {}]
  %s2 = inlined_call_operand.vmem [shape: f32[10,128], index: 2, kind: input, shape index: {}]
  %s3 = inlined_call_operand.vmem [shape: f32[1,128], index: 3, kind: input, shape index: {}]
  %s4 = inlined_call_operand.vmem [shape: f32[128,16], index: 4, kind: input, shape index: {}]
  %s5 = inlined_call_operand.vmem [shape: f32[1,16], index: 5, kind: input, shape index: {}]
  %s6 = inlined_call_operand.vmem [shape: f32[1,16], index: 6, kind: input, shape index: {}]
  %s7 = inlined_call_operand.vmem [shape: f32[1,16], index: 7, kind: input, shape index: {}]
  %s8 = inlined_call_operand.hbm [shape: f32[16,16], index: 8, kind: output, shape index: {}]
  %s9 = sld [smem:[#allocation0]]
  $region65: #{tpu_custom_call.1} parent=0
    _
  %s11 = ssub.s32 1, %s9
  %s12 = scalar_select 0, %s11, %s9
  $region1: #{tpu_custom_call.1} parent=0
    #allocation2 [shape = 'u8[8192]{0}', space=vmem, size = 0x2000, scoped, tag = 'output window, operand 0']
    #allocation3 [shape = 's32[2]{0}', space=sflag, size = 0x8, scoped, tag = 'scoped memory for tpu_custom_call.1']
    %13 = vsyncpa [#allocation3], 0
    %s14 = scalar_lea.sflag [#allocation3], 1
    %15 = vsyncpa %s14, 0
    loop: start=0, step=1, limit=4
    $region2: #{tpu_custom_call.1} parent=1 // loop_pre_header
      _
    $region3: #{tpu_custom_call.1} parent=1 // loop_header
      %s17 = sphi 0, %s21
      %p18 = scmp.ge.s32.totalorder %s17, 4
      %s27 = sphi 0, %s29
      %s30 = sphi 0, %s27
      %s31 = sphi 0, %s30
      %s47 = sphi 0, %s31
      %s51 = sphi 0, %s51
      %s53 = sphi 0, %s51
      %s54 = sphi 0, %s53
      %s68 = sphi 0, %s54
      %s72 = sphi 0, %s72
      %s74 = sphi 0, %s72
      %s75 = sphi 0, %s74
      %s89 = sphi 0, %s75
      %s93 = sphi 0, %s93
      %s95 = sphi 0, %s93
      %s96 = sphi 0, %s95
      %s110 = sphi 0, %s96
      %s114 = sphi 0, %s114
      %s116 = sphi 0, %s114
      %s117 = sphi 0, %s116
      %s131 = sphi 0, %s117
      %s135 = sphi 0, %s135
      %s137 = sphi 0, %s135
      %s138 = sphi 0, %s137
      %s152 = sphi 0, %s138
      %s156 = sphi 0, %s156
      %s158 = sphi 0, %s156
      %s159 = sphi 0, %s158
      %s173 = sphi 0, %s159
      %s177 = sphi 0, %s177
      %s179 = sphi 0, %s177
      %s180 = sphi 0, %s179
      %s194 = sphi 0, %s180
      %s200 = sphi 0, %s202
      %s203 = sphi 0, %s200
      %s204 = sphi 0, %s203
      %s220 = sphi 0, %s204
    $region4: #{tpu_custom_call.1} parent=1 // loop_header_branch
      %20 = sbr.rel (%p18) target = $region8
    $region5: #{tpu_custom_call.1} parent=1 // loop_body
      %s22 = ssub.s32 %s17, 1
      %s23 = ssub.s32 %s17, 2
      %s24 = sadd.s32 %s17, 1
      %s25 = ssub.s32 %s17, %s24
      %p26 = scmp.eq.s32.totalorder %s25, 0
      %s28 = sadd.s32 %s27, 1
      %s29 = scalar_select %p26, %s27, %s28
      %p32 = pneg %p26
      %p33 = scmp.eq.s32.totalorder %s17, 1
      %p34 = por %p32, %p33
      %p35 = scmp.ne.s32.totalorder %s27, %s30
      %p36 = scmp.eq.s32.totalorder %s17, 0
      %p37 = por %p35, %p36
      %p38 = scmp.ne.s32.totalorder %s27, %s30
      %p39 = scmp.eq.s32.totalorder %s22, 1
      %p40 = por %p38, %p39
      %p41 = scmp.ne.s32.totalorder %s30, %s31
      %p42 = scmp.eq.s32.totalorder %s22, 0
      %p43 = por %p41, %p42
      %p44 = scmp.ne.s32.totalorder %s30, %s31
      %p45 = scmp.eq.s32.totalorder %s23, 1
      %p46 = por %p44, %p45
      %p48 = scmp.ne.s32.totalorder %s31, %s47
      %p49 = scmp.eq.s32.totalorder %s23, 0
      %p50 = por %p48, %p49
      %s52 = sadd.s32 %s51, 1
      %p55 = scmp.eq.s32.totalorder %s17, 1
      %p56 = scmp.ne.s32.totalorder %s51, %s53
      %p57 = scmp.eq.s32.totalorder %s17, 0
      %p58 = por %p56, %p57
      %p59 = scmp.ne.s32.totalorder %s51, %s53
      %p60 = scmp.eq.s32.totalorder %s22, 1
      %p61 = por %p59, %p60
      %p62 = scmp.ne.s32.totalorder %s53, %s54
      %p63 = scmp.eq.s32.totalorder %s22, 0
      %p64 = por %p62, %p63
      %p65 = scmp.ne.s32.totalorder %s53, %s54
      %p66 = scmp.eq.s32.totalorder %s23, 1
      %p67 = por %p65, %p66
      %p69 = scmp.ne.s32.totalorder %s54, %s68
      %p70 = scmp.eq.s32.totalorder %s23, 0
      %p71 = por %p69, %p70
      %s73 = sadd.s32 %s72, 1
      %p76 = scmp.eq.s32.totalorder %s17, 1
      %p77 = scmp.ne.s32.totalorder %s72, %s74
      %p78 = scmp.eq.s32.totalorder %s17, 0
      %p79 = por %p77, %p78
      %p80 = scmp.ne.s32.totalorder %s72, %s74
      %p81 = scmp.eq.s32.totalorder %s22, 1
      %p82 = por %p80, %p81
      %p83 = scmp.ne.s32.totalorder %s74, %s75
      %p84 = scmp.eq.s32.totalorder %s22, 0
      %p85 = por %p83, %p84
      %p86 = scmp.ne.s32.totalorder %s74, %s75
      %p87 = scmp.eq.s32.totalorder %s23, 1
      %p88 = por %p86, %p87
      %p90 = scmp.ne.s32.totalorder %s75, %s89
      %p91 = scmp.eq.s32.totalorder %s23, 0
      %p92 = por %p90, %p91
      %s94 = sadd.s32 %s93, 1
      %p97 = scmp.eq.s32.totalorder %s17, 1
      %p98 = scmp.ne.s32.totalorder %s93, %s95
      %p99 = scmp.eq.s32.totalorder %s17, 0
      %p100 = por %p98, %p99
      %p101 = scmp.ne.s32.totalorder %s93, %s95
      %p102 = scmp.eq.s32.totalorder %s22, 1
      %p103 = por %p101, %p102
      %p104 = scmp.ne.s32.totalorder %s95, %s96
      %p105 = scmp.eq.s32.totalorder %s22, 0
      %p106 = por %p104, %p105
      %p107 = scmp.ne.s32.totalorder %s95, %s96
      %p108 = scmp.eq.s32.totalorder %s23, 1
      %p109 = por %p107, %p108
      %p111 = scmp.ne.s32.totalorder %s96, %s110
      %p112 = scmp.eq.s32.totalorder %s23, 0
      %p113 = por %p111, %p112
      %s115 = sadd.s32 %s114, 1
      %p118 = scmp.eq.s32.totalorder %s17, 1
      %p119 = scmp.ne.s32.totalorder %s114, %s116
      %p120 = scmp.eq.s32.totalorder %s17, 0
      %p121 = por %p119, %p120
      %p122 = scmp.ne.s32.totalorder %s114, %s116
      %p123 = scmp.eq.s32.totalorder %s22, 1
      %p124 = por %p122, %p123
      %p125 = scmp.ne.s32.totalorder %s116, %s117
      %p126 = scmp.eq.s32.totalorder %s22, 0
      %p127 = por %p125, %p126
      %p128 = scmp.ne.s32.totalorder %s116, %s117
      %p129 = scmp.eq.s32.totalorder %s23, 1
      %p130 = por %p128, %p129
      %p132 = scmp.ne.s32.totalorder %s117, %s131
      %p133 = scmp.eq.s32.totalorder %s23, 0
      %p134 = por %p132, %p133
      %s136 = sadd.s32 %s135, 1
      %p139 = scmp.eq.s32.totalorder %s17, 1
      %p140 = scmp.ne.s32.totalorder %s135, %s137
      %p141 = scmp.eq.s32.totalorder %s17, 0
      %p142 = por %p140, %p141
      %p143 = scmp.ne.s32.totalorder %s135, %s137
      %p144 = scmp.eq.s32.totalorder %s22, 1
      %p145 = por %p143, %p144
      %p146 = scmp.ne.s32.totalorder %s137, %s138
      %p147 = scmp.eq.s32.totalorder %s22, 0
      %p148 = por %p146, %p147
      %p149 = scmp.ne.s32.totalorder %s137, %s138
      %p150 = scmp.eq.s32.totalorder %s23, 1
      %p151 = por %p149, %p150
      %p153 = scmp.ne.s32.totalorder %s138, %s152
      %p154 = scmp.eq.s32.totalorder %s23, 0
      %p155 = por %p153, %p154
      %s157 = sadd.s32 %s156, 1
      %p160 = scmp.eq.s32.totalorder %s17, 1
      %p161 = scmp.ne.s32.totalorder %s156, %s158
      %p162 = scmp.eq.s32.totalorder %s17, 0
      %p163 = por %p161, %p162
      %p164 = scmp.ne.s32.totalorder %s156, %s158
      %p165 = scmp.eq.s32.totalorder %s22, 1
      %p166 = por %p164, %p165
      %p167 = scmp.ne.s32.totalorder %s158, %s159
      %p168 = scmp.eq.s32.totalorder %s22, 0
      %p169 = por %p167, %p168
      %p170 = scmp.ne.s32.totalorder %s158, %s159
      %p171 = scmp.eq.s32.totalorder %s23, 1
      %p172 = por %p170, %p171
      %p174 = scmp.ne.s32.totalorder %s159, %s173
      %p175 = scmp.eq.s32.totalorder %s23, 0
      %p176 = por %p174, %p175
      %s178 = sadd.s32 %s177, 1
      %p181 = scmp.eq.s32.totalorder %s17, 1
      %p182 = scmp.ne.s32.totalorder %s177, %s179
      %p183 = scmp.eq.s32.totalorder %s17, 0
      %p184 = por %p182, %p183
      %p185 = scmp.ne.s32.totalorder %s177, %s179
      %p186 = scmp.eq.s32.totalorder %s22, 1
      %p187 = por %p185, %p186
      %p188 = scmp.ne.s32.totalorder %s179, %s180
      %p189 = scmp.eq.s32.totalorder %s22, 0
      %p190 = por %p188, %p189
      %p191 = scmp.ne.s32.totalorder %s179, %s180
      %p192 = scmp.eq.s32.totalorder %s23, 1
      %p193 = por %p191, %p192
      %p195 = scmp.ne.s32.totalorder %s180, %s194
      %p196 = scmp.eq.s32.totalorder %s23, 0
      %p197 = por %p195, %p196
      %s198 = ssub.s32 %s17, %s24
      %p199 = scmp.eq.s32.totalorder %s198, 0
      %s201 = sadd.s32 %s200, 1
      %s202 = scalar_select %p199, %s200, %s201
      %p205 = pneg %p199
      %p206 = scmp.eq.s32.totalorder %s17, 1
      %p207 = por %p205, %p206
      %p208 = scmp.ne.s32.totalorder %s200, %s203
      %p209 = scmp.eq.s32.totalorder %s17, 0
      %p210 = por %p208, %p209
      %p211 = scmp.ne.s32.totalorder %s200, %s203
      %p212 = scmp.eq.s32.totalorder %s22, 1
      %p213 = por %p211, %p212
      %p214 = scmp.ne.s32.totalorder %s203, %s204
      %p215 = scmp.eq.s32.totalorder %s22, 0
      %p216 = por %p214, %p215
      %p217 = scmp.ne.s32.totalorder %s203, %s204
      %p218 = scmp.eq.s32.totalorder %s23, 1
      %p219 = por %p217, %p218
      %p221 = scmp.ne.s32.totalorder %s204, %s220
      %p222 = scmp.eq.s32.totalorder %s23, 0
      %p223 = por %p221, %p222
      %p224 = scmp.le.s32.totalorder 1, %s17
      %p225 = scmp.lt.s32.totalorder %s17, 3
      %p226 = pnand %p224, %p225
      %p227 = pneg %p226
      // Predicated region
      $region9: #{tpu_custom_call.1} parent=5 // pred_check
        _
      $region10: #{tpu_custom_call.1} parent=5 // pred_check_branch
        %229 = sbr.rel (%p226) target = $region12
      $region11: #{tpu_custom_call.1} parent=5 // pred_region
        %s230 = ssub.s32 %s17, 1
        // Predicated region
        $region13: #{tpu_custom_call.1} parent=11 // pred_check
          %p231 = pneg %p64
        $region14: #{tpu_custom_call.1} parent=11 // pred_check_branch
          %233 = sbr.rel (%p231) target = $region16
        $region15: #{tpu_custom_call.1} parent=11 // pred_region
          _
        $region16: #{tpu_custom_call.1} parent=11 // pred_fallthru
          _
        // Predicated region
        $region17: #{tpu_custom_call.1} parent=11 // pred_check
          %p234 = pneg %p85
        $region18: #{tpu_custom_call.1} parent=11 // pred_check_branch
          %236 = sbr.rel (%p234) target = $region20
        $region19: #{tpu_custom_call.1} parent=11 // pred_region
          _
        $region20: #{tpu_custom_call.1} parent=11 // pred_fallthru
          _
        // Predicated region
        $region21: #{tpu_custom_call.1} parent=11 // pred_check
          %p237 = pneg %p106
        $region22: #{tpu_custom_call.1} parent=11 // pred_check_branch
          %239 = sbr.rel (%p237) target = $region24
        $region23: #{tpu_custom_call.1} parent=11 // pred_region
          _
        $region24: #{tpu_custom_call.1} parent=11 // pred_fallthru
          _
        // Predicated region
        $region25: #{tpu_custom_call.1} parent=11 // pred_check
          %p240 = pneg %p127
        $region26: #{tpu_custom_call.1} parent=11 // pred_check_branch
          %242 = sbr.rel (%p240) target = $region28
        $region27: #{tpu_custom_call.1} parent=11 // pred_region
          _
        $region28: #{tpu_custom_call.1} parent=11 // pred_fallthru
          _
        // Predicated region
        $region29: #{tpu_custom_call.1} parent=11 // pred_check
          %p243 = pneg %p148
        $region30: #{tpu_custom_call.1} parent=11 // pred_check_branch
          %245 = sbr.rel (%p243) target = $region32
        $region31: #{tpu_custom_call.1} parent=11 // pred_region
          _
        $region32: #{tpu_custom_call.1} parent=11 // pred_fallthru
          _
        // Predicated region
        $region33: #{tpu_custom_call.1} parent=11 // pred_check
          %p246 = pneg %p169
        $region34: #{tpu_custom_call.1} parent=11 // pred_check_branch
          %248 = sbr.rel (%p246) target = $region36
        $region35: #{tpu_custom_call.1} parent=11 // pred_region
          _
        $region36: #{tpu_custom_call.1} parent=11 // pred_fallthru
          _
        // Predicated region
        $region37: #{tpu_custom_call.1} parent=11 // pred_check
          %p249 = pneg %p190
        $region38: #{tpu_custom_call.1} parent=11 // pred_check_branch
          %251 = sbr.rel (%p249) target = $region40
        $region39: #{tpu_custom_call.1} parent=11 // pred_region
          _
        $region40: #{tpu_custom_call.1} parent=11 // pred_fallthru
          _
      $region12: #{tpu_custom_call.1} parent=5 // pred_fallthru
        _
      %p252 = scmp.lt.s32.totalorder %s17, 2
      // Predicated region
      $region41: #{tpu_custom_call.1} parent=5 // pred_check
        %p253 = pneg %p252
      $region42: #{tpu_custom_call.1} parent=5 // pred_check_branch
        %255 = sbr.rel (%p253) target = $region44
      $region43: #{tpu_custom_call.1} parent=5 // pred_region
        // Predicated region
        $region45: #{tpu_custom_call.1} parent=43 // pred_check
          %p256 = pneg %p37
        $region46: #{tpu_custom_call.1} parent=43 // pred_check_branch
          %258 = sbr.rel (%p256) target = $region48
        $region47: #{tpu_custom_call.1} parent=43 // pred_region
          %p259 = scmp.lt.s32.totalorder %s17, 1
          %s260 = scalar_select %p259, %s17, 1
          %s261 = smul.addr %s260, 8
          %s262 = scalar_lea.vmem %s0, %s261
        $region48: #{tpu_custom_call.1} parent=43 // pred_fallthru
          _
      $region44: #{tpu_custom_call.1} parent=5 // pred_fallthru
        _
      %p263 = scmp.le.s32.totalorder 1, %s17
      %p264 = scmp.lt.s32.totalorder %s17, 3
      %p265 = pnand %p263, %p264
      %p266 = pneg %p265
      // Predicated region
      $region49: #{tpu_custom_call.1} parent=5 // pred_check
        _
      $region50: #{tpu_custom_call.1} parent=5 // pred_check_branch
        %268 = sbr.rel (%p265) target = $region52
      $region51: #{tpu_custom_call.1} parent=5 // pred_region
        %s269 = ssub.s32 %s17, 1
        %p270 = scmp.lt.s32.totalorder %s22, 1
        %s271 = scalar_select %p270, %s22, 1
        %s272 = smul.addr %s271, 8
        %s273 = scalar_lea.vmem %s0, %s272
        %p274 = pneg %p43
        %p275 = pneg %p40
        %p276 = pneg %p64
        %p277 = pneg %p61
        %p278 = pneg %p85
        %p279 = pneg %p82
        %p280 = pneg %p106
        %p281 = pneg %p103
        %p282 = pneg %p127
        %p283 = pneg %p124
        %p284 = pneg %p148
        %p285 = pneg %p145
        %p286 = pneg %p169
        %p287 = pneg %p166
        %p288 = pneg %p190
        %p289 = pneg %p187
        %p290 = pneg %p216
        %p291 = pneg %p213
        %s292 = sand.u32 %s203, 1
        %s293 = scalar_lea.sflag [#allocation3], %s292
        %s294 = sand.u32 %s203, 1
        %s295 = smul.addr %s294, 8
        %s296 = scalar_lea.vmem [#allocation2], %s295
        %p297 = scmp.lt.s32.totalorder %s22, 1
        %s298 = scalar_select %p297, %s22, 1
        %s299 = smul.addr %s298, 8
        %s300 = scalar_lea.vmem %s0, %s299
        %v301 = vld [vmem:[%s300] sm:$0xff]
        %v302 = vld [vmem:[%s2] sm:$0xff]
        %v303 = vld [vmem:[%s2 + $0x8] sm:$0x3]
        %vm304 = vcmask 80896
        %v306 = vsel %vm304, %v301, 0
        %vm308 = vcmask 1041408
        %v310 = vsel %vm308, %v303, 0
        %312 = vmatprep.subr.mxu0 0.0
        %313 = vmatpush1.msra.mxu0 %v302
        %314 = vmatprep.subr.mxu0 0.0
        %315 = vmatpush1.msra.mxu0 %v310
        %316 = vmatprep.subr.mxu0 0.0
        %317 = vmatpush1.msra.mxu0 0.0
        %318 = vmatprep.subr.mxu0 0.0
        %319 = vmatpush1.msra.mxu0 0.0
        %320 = vmatprep.subr.mxu0 0.0
        %321 = vmatpush1.msra.mxu0 0.0
        %322 = vmatprep.subr.mxu0 0.0
        %323 = vmatpush1.msra.mxu0 0.0
        %324 = vmatprep.subr.mxu0 0.0
        %325 = vmatpush1.msra.mxu0 0.0
        %326 = vmatprep.subr.mxu0 0.0
        %327 = vmatpush1.msra.mxu0 0.0
        %328 = vmatprep.subr.mxu0 0.0
        %329 = vmatpush1.msra.mxu0 0.0
        %330 = vmatprep.subr.mxu0 0.0
        %331 = vmatpush1.msra.mxu0 0.0
        %332 = vmatprep.subr.mxu0 0.0
        %333 = vmatpush1.msra.mxu0 0.0
        %334 = vmatprep.subr.mxu0 0.0
        %335 = vmatpush1.msra.mxu0 0.0
        %336 = vmatprep.subr.mxu0 0.0
        %337 = vmatpush1.msra.mxu0 0.0
        %338 = vmatprep.subr.mxu0 0.0
        %339 = vmatpush1.msra.mxu0 0.0
        %340 = vmatprep.subr.mxu0 0.0
        %341 = vmatpush1.msra.mxu0 0.0
        %342 = vmatprep.subr.mxu0 0.0
        %343 = vmatpush1.msra.mxu0 0.0
        %344 = vmatprep.subr.mxu0 0.0
        %345 = vmatpush1.msra.mxu0 0.0
        %346 = vmatprep.subr.mxu0 0.0
        %347 = vmatpush1.msra.mxu0 0.0
        %348 = vmatprep.subr.mxu0 0.0
        %349 = vmatpush1.msra.mxu0 0.0
        %350 = vmatprep.subr.mxu0 0.0
        %351 = vmatpush1.msra.mxu0 0.0
        %352 = vmatprep.subr.mxu0 0.0
        %353 = vmatpush1.msra.mxu0 0.0
        %354 = vmatprep.subr.mxu0 0.0
        %355 = vmatpush1.msra.mxu0 0.0
        %356 = vmatprep.subr.mxu0 0.0
        %357 = vmatpush1.msra.mxu0 0.0
        %358 = vmatprep.subr.mxu0 0.0
        %359 = vmatpush1.msra.mxu0 0.0
        %360 = vmatprep.subr.mxu0 0.0
        %361 = vmatpush1.msra.mxu0 0.0
        %362 = vmatprep.subr.mxu0 0.0
        %363 = vmatpush1.msra.mxu0 0.0
        %364 = vmatprep.subr.mxu0 0.0
        %365 = vmatpush1.msra.mxu0 0.0
        %366 = vmatprep.subr.mxu0 0.0
        %367 = vmatpush1.msra.mxu0 0.0
        %368 = vmatprep.subr.mxu0 0.0
        %369 = vmatpush1.msra.mxu0 0.0
        %370 = vmatprep.subr.mxu0 0.0
        %371 = vmatpush1.msra.mxu0 0.0
        %372 = vmatprep.subr.mxu0 0.0
        %373 = vmatpush1.msra.mxu0 0.0
        %374 = vmatprep.subr.mxu0 0.0
        %375 = vmatpush1.msra.mxu0 0.0
        %376 = vmatprep.mubr.f32.mxu0 0.0
        %377 = vmatmul.mubr.f32.gmra.mrb[0].mxu0 %v306
        %v378 = vpop.f32.mrb[0].mxu0
        %v379 = vadd.f32 0.0, %v378
        %v380 = vpop.f32.mrb[0].mxu0
        %381 = vdwg.mxu0
        %v382 = vld [vmem:[%s3] sm:$0x1]
        %v384 = vlaneseq
        %v385 = vshrl.u32 %v384, 7
        %v386 = vsub.s32 0, %v385
        %v387 = vrot.slane %v382, %v386
        %vm389 = vcmp.eq.f32.partialorder %v379, %v387
        %v390 = vsel %vm389, 1, 0
        %v391 = vcvt.s32.f32 %v390
        %v392 = vld [vmem:[%s1] sm:$0xff]
        %v393 = vld [vmem:[%s1 + $0x8] sm:$0x3]
        %v394 = vld [vmem:[%s4] sm:$0xff]
        %v395 = vld [vmem:[%s4 + $0x8] sm:$0xff]
        %v396 = vld [vmem:[%s4 + $0x10] sm:$0xff]
        %v397 = vld [vmem:[%s4 + $0x18] sm:$0xff]
        %v398 = vld [vmem:[%s4 + $0x20] sm:$0xff]
        %v399 = vld [vmem:[%s4 + $0x28] sm:$0xff]
        %v400 = vld [vmem:[%s4 + $0x30] sm:$0xff]
        %v401 = vld [vmem:[%s4 + $0x38] sm:$0xff]
        %v402 = vld [vmem:[%s4 + $0x40] sm:$0xff]
        %v403 = vld [vmem:[%s4 + $0x48] sm:$0xff]
        %v404 = vld [vmem:[%s4 + $0x50] sm:$0xff]
        %v405 = vld [vmem:[%s4 + $0x58] sm:$0xff]
        %v406 = vld [vmem:[%s4 + $0x60] sm:$0xff]
        %v407 = vld [vmem:[%s4 + $0x68] sm:$0xff]
        %v408 = vld [vmem:[%s4 + $0x70] sm:$0xff]
        %v409 = vld [vmem:[%s4 + $0x78] sm:$0xff]
        %410 = vmatprep.subr.mxu0 0.0
        %411 = vmatpush1.msra.mxu0 %v394
        %412 = vmatprep.subr.mxu0 0.0
        %413 = vmatpush1.msra.mxu0 %v395
        %414 = vmatprep.subr.mxu0 0.0
        %415 = vmatpush1.msra.mxu0 %v396
        %416 = vmatprep.subr.mxu0 0.0
        %417 = vmatpush1.msra.mxu0 %v397
        %418 = vmatprep.subr.mxu0 0.0
        %419 = vmatpush1.msra.mxu0 %v398
        %420 = vmatprep.subr.mxu0 0.0
        %421 = vmatpush1.msra.mxu0 %v399
        %422 = vmatprep.subr.mxu0 0.0
        %423 = vmatpush1.msra.mxu0 %v400
        %424 = vmatprep.subr.mxu0 0.0
        %425 = vmatpush1.msra.mxu0 %v401
        %426 = vmatprep.subr.mxu0 0.0
        %427 = vmatpush1.msra.mxu0 %v402
        %428 = vmatprep.subr.mxu0 0.0
        %429 = vmatpush1.msra.mxu0 %v403
        %430 = vmatprep.subr.mxu0 0.0
        %431 = vmatpush1.msra.mxu0 %v404
        %432 = vmatprep.subr.mxu0 0.0
        %433 = vmatpush1.msra.mxu0 %v405
        %434 = vmatprep.subr.mxu0 0.0
        %435 = vmatpush1.msra.mxu0 %v406
        %436 = vmatprep.subr.mxu0 0.0
        %437 = vmatpush1.msra.mxu0 %v407
        %438 = vmatprep.subr.mxu0 0.0
        %439 = vmatpush1.msra.mxu0 %v408
        %440 = vmatprep.subr.mxu0 0.0
        %441 = vmatpush1.msra.mxu0 %v409
        %442 = vmatprep.subr.mxu0 0.0
        %443 = vmatpush1.msra.mxu0 0.0
        %444 = vmatprep.subr.mxu0 0.0
        %445 = vmatpush1.msra.mxu0 0.0
        %446 = vmatprep.subr.mxu0 0.0
        %447 = vmatpush1.msra.mxu0 0.0
        %448 = vmatprep.subr.mxu0 0.0
        %449 = vmatpush1.msra.mxu0 0.0
        %450 = vmatprep.subr.mxu0 0.0
        %451 = vmatpush1.msra.mxu0 0.0
        %452 = vmatprep.subr.mxu0 0.0
        %453 = vmatpush1.msra.mxu0 0.0
        %454 = vmatprep.subr.mxu0 0.0
        %455 = vmatpush1.msra.mxu0 0.0
        %456 = vmatprep.subr.mxu0 0.0
        %457 = vmatpush1.msra.mxu0 0.0
        %458 = vmatprep.subr.mxu0 0.0
        %459 = vmatpush1.msra.mxu0 0.0
        %460 = vmatprep.subr.mxu0 0.0
        %461 = vmatpush1.msra.mxu0 0.0
        %462 = vmatprep.subr.mxu0 0.0
        %463 = vmatpush1.msra.mxu0 0.0
        %464 = vmatprep.subr.mxu0 0.0
        %465 = vmatpush1.msra.mxu0 0.0
        %466 = vmatprep.subr.mxu0 0.0
        %467 = vmatpush1.msra.mxu0 0.0
        %468 = vmatprep.subr.mxu0 0.0
        %469 = vmatpush1.msra.mxu0 0.0
        %470 = vmatprep.subr.mxu0 0.0
        %471 = vmatpush1.msra.mxu0 0.0
        %472 = vmatprep.subr.mxu0 0.0
        %473 = vmatpush1.msra.mxu0 0.0
        %474 = vmatprep.mubr.f32.mxu0 0.0
        %475 = vmatmul.mubr.f32.gmra.mrb[0].mxu0 %v391
        %v476 = vpop.f32.mrb[0].mxu0
        %v477 = vadd.f32 0.0, %v476
        %v478 = vpop.f32.mrb[0].mxu0
        %479 = vdwg.mxu0
        %v481 = vsel %vm308, %v393, 0
        %483 = vmatprep.subr.mxu0 0.0
        %484 = vmatpush1.msra.mxu0 %v392
        %485 = vmatprep.subr.mxu0 0.0
        %486 = vmatpush1.msra.mxu0 %v481
        %487 = vmatprep.subr.mxu0 0.0
        %488 = vmatpush1.msra.mxu0 0.0
        %489 = vmatprep.subr.mxu0 0.0
        %490 = vmatpush1.msra.mxu0 0.0
        %491 = vmatprep.subr.mxu0 0.0
        %492 = vmatpush1.msra.mxu0 0.0
        %493 = vmatprep.subr.mxu0 0.0
        %494 = vmatpush1.msra.mxu0 0.0
        %495 = vmatprep.subr.mxu0 0.0
        %496 = vmatpush1.msra.mxu0 0.0
        %497 = vmatprep.subr.mxu0 0.0
        %498 = vmatpush1.msra.mxu0 0.0
        %499 = vmatprep.subr.mxu0 0.0
        %500 = vmatpush1.msra.mxu0 0.0
        %501 = vmatprep.subr.mxu0 0.0
        %502 = vmatpush1.msra.mxu0 0.0
        %503 = vmatprep.subr.mxu0 0.0
        %504 = vmatpush1.msra.mxu0 0.0
        %505 = vmatprep.subr.mxu0 0.0
        %506 = vmatpush1.msra.mxu0 0.0
        %507 = vmatprep.subr.mxu0 0.0
        %508 = vmatpush1.msra.mxu0 0.0
        %509 = vmatprep.subr.mxu0 0.0
        %510 = vmatpush1.msra.mxu0 0.0
        %511 = vmatprep.subr.mxu0 0.0
        %512 = vmatpush1.msra.mxu0 0.0
        %513 = vmatprep.subr.mxu0 0.0
        %514 = vmatpush1.msra.mxu0 0.0
        %515 = vmatprep.subr.mxu0 0.0
        %516 = vmatpush1.msra.mxu0 0.0
        %517 = vmatprep.subr.mxu0 0.0
        %518 = vmatpush1.msra.mxu0 0.0
        %519 = vmatprep.subr.mxu0 0.0
        %520 = vmatpush1.msra.mxu0 0.0
        %521 = vmatprep.subr.mxu0 0.0
        %522 = vmatpush1.msra.mxu0 0.0
        %523 = vmatprep.subr.mxu0 0.0
        %524 = vmatpush1.msra.mxu0 0.0
        %525 = vmatprep.subr.mxu0 0.0
        %526 = vmatpush1.msra.mxu0 0.0
        %527 = vmatprep.subr.mxu0 0.0
        %528 = vmatpush1.msra.mxu0 0.0
        %529 = vmatprep.subr.mxu0 0.0
        %530 = vmatpush1.msra.mxu0 0.0
        %531 = vmatprep.subr.mxu0 0.0
        %532 = vmatpush1.msra.mxu0 0.0
        %533 = vmatprep.subr.mxu0 0.0
        %534 = vmatpush1.msra.mxu0 0.0
        %535 = vmatprep.subr.mxu0 0.0
        %536 = vmatpush1.msra.mxu0 0.0
        %537 = vmatprep.subr.mxu0 0.0
        %538 = vmatpush1.msra.mxu0 0.0
        %539 = vmatprep.subr.mxu0 0.0
        %540 = vmatpush1.msra.mxu0 0.0
        %541 = vmatprep.subr.mxu0 0.0
        %542 = vmatpush1.msra.mxu0 0.0
        %543 = vmatprep.subr.mxu0 0.0
        %544 = vmatpush1.msra.mxu0 0.0
        %545 = vmatprep.subr.mxu0 0.0
        %546 = vmatpush1.msra.mxu0 0.0
        %547 = vmatprep.mubr.f32.mxu0 0.0
        %548 = vmatmul.mubr.f32.gmra.mrb[0].mxu0 %v306
        %v549 = vpop.f32.mrb[0].mxu0
        %v550 = vadd.f32 %v477, %v549
        %v551 = vpop.f32.mrb[0].mxu0
        %552 = vdwg.mxu0
        %v553 = vld [vmem:[%s5] sm:$0x1]
        %v555 = vlaneseq
        %v556 = vshrl.u32 %v555, 7
        %v557 = vsub.s32 0, %v556
        %v558 = vrot.slane %v553, %v557
        %v560 = vadd.f32 %v550, %v558
        %v561 = vmax.f32 %v560, 0.0
        %v562 = vld [vmem:[%s6] sm:$0x1]
        %v564 = vlaneseq
        %v565 = vshrl.u32 %v564, 7
        %v566 = vsub.s32 0, %v565
        %v567 = vrot.slane %v562, %v566
        %v569 = vmul.f32 %v561, %v567
        %v570 = vld [vmem:[%s7] sm:$0x1]
        %v572 = vlaneseq
        %v573 = vshrl.u32 %v572, 7
        %v574 = vsub.s32 0, %v573
        %v575 = vrot.slane %v570, %v574
        %v577 = vadd.f32 %v569, %v575
        %vm578 = vcmask 130048
        %579 = vst.msk [vmem:[%s296] sm:$0xff] %vm578, %v577
        %s580 = sand.u32 %s203, 1
        %s581 = scalar_lea.sflag [#allocation3], %s580
        %s582 = sand.u32 %s203, 1
        %s583 = smul.addr %s582, 8
        %s584 = scalar_lea.vmem [#allocation2], %s583
        // Predicated region
        $region53: #{tpu_custom_call.1} parent=51 // pred_check
          %p585 = pneg %p213
        $region54: #{tpu_custom_call.1} parent=51 // pred_check_branch
          %587 = sbr.rel (%p585) target = $region56
        $region55: #{tpu_custom_call.1} parent=51 // pred_region
          %s589 = ssub.s32 128, 128
          %590 = vsyncadd %s581, %s589
          %s591 = smul.addr %s22, 128
          %s592 = scalar_lea.hbm %s8, %s591
          %s594 = sshll.u32 %s584, 4
          %s595 = int_to_ptr.vmem [resolvable:$true] %s594
          %597 = dma.vmem_to_hbm [thread:$0]  %s595, 128, %s592, %s581
        $region56: #{tpu_custom_call.1} parent=51 // pred_fallthru
          _
      $region52: #{tpu_custom_call.1} parent=5 // pred_fallthru
        _
      %p598 = scmp.le.s32.totalorder 2, %s17
      // Predicated region
      $region57: #{tpu_custom_call.1} parent=5 // pred_check
        %p599 = pneg %p598
      $region58: #{tpu_custom_call.1} parent=5 // pred_check_branch
        %601 = sbr.rel (%p599) target = $region60
      $region59: #{tpu_custom_call.1} parent=5 // pred_region
        %s602 = ssub.s32 %s17, 2
        // Predicated region
        $region61: #{tpu_custom_call.1} parent=59 // pred_check
          %p603 = pneg %p219
        $region62: #{tpu_custom_call.1} parent=59 // pred_check_branch
          %605 = sbr.rel (%p603) target = $region64
        $region63: #{tpu_custom_call.1} parent=59 // pred_region
          %s606 = sand.u32 %s204, 1
          %s607 = scalar_lea.sflag [#allocation3], %s606
          %s608 = sand.u32 %s204, 1
          %s609 = smul.addr %s608, 8
          %s610 = scalar_lea.vmem [#allocation2], %s609
          %611 = dma.done %s607, 128
        $region64: #{tpu_custom_call.1} parent=59 // pred_fallthru
          _
      $region60: #{tpu_custom_call.1} parent=5 // pred_fallthru
        _
    $region6: #{tpu_custom_call.1} parent=1 // loop_footer
      %s21 = sadd.s32 1, %s17
    $region7: #{tpu_custom_call.1} parent=1 // loop_footer_branch
      %16 = sbr.rel target = $region3
    $region8: #{tpu_custom_call.1} parent=1 // loop_exit
      _
    %612 = vsyncpa [#allocation3], 1
    %s613 = scalar_lea.sflag [#allocation3], 1
    %614 = vsyncpa %s613, 1

</llo_original>
